<compile_context>
chip_gen: v5e
topology: v5e:2x2
jax: 0.10.0
libtpu: 0.0.40
codegen_flags: <defaults>
</compile_context>

<pallas_src>
import math

import jax
import jax.numpy as jnp
from jax.experimental import pallas as pl
from jax.experimental.pallas import tpu as pltpu


# ----------------------------------------------------------------------------
# Stage 1: per-etype dense transform  Wh = X @ W   (bias folded into stage 2)
# ----------------------------------------------------------------------------
def _wh_kernel(x_ref, w_ref, wh_ref):
    wh_ref[...] = jnp.dot(
        x_ref[...], w_ref[...], preferred_element_type=jnp.float32
    ).astype(wh_ref.dtype)


def _wh_all_etypes(x_stack, w_stack, tile_src):
    """x_stack (R, Nsrc_pad, IN_pad) bf16, w_stack (R, IN_pad, OUT_pad) bf16."""
    r, n_src_pad, in_pad = x_stack.shape
    out_pad = w_stack.shape[2]
    return pl.pallas_call(
        _wh_kernel,
        out_shape=jax.ShapeDtypeStruct((r, n_src_pad, out_pad), jnp.bfloat16),
        grid=(r, n_src_pad // tile_src),
        in_specs=[
            pl.BlockSpec((None, tile_src, in_pad), lambda e, s: (e, s, 0)),
            pl.BlockSpec((None, in_pad, out_pad), lambda e, s: (e, 0, 0)),
        ],
        out_specs=pl.BlockSpec((None, tile_src, out_pad), lambda e, s: (e, s, 0)),
        compiler_params=pltpu.CompilerParams(
            dimension_semantics=("parallel", "parallel"),
            vmem_limit_bytes=48 * 1024 * 1024,
        ),
    )(x_stack, w_stack)


# ----------------------------------------------------------------------------
# Stage 2: fused neighborhood-mean aggregation + bias + cross-etype mean.
# Grid = (dst_tile [parallel], etype [arbitrary], K src tile [arbitrary, last]).
# Scalar prefetch: n_valid[e] = number of K tiles that can contain real edges.
# ----------------------------------------------------------------------------
def _agg_kernel(nvalid_ref, a_ref, wh_ref, b_ref, out_ref, acc_ref, agg_ref, deg_ref):
    e = pl.program_id(1)
    k = pl.program_id(2)
    ne = pl.num_programs(1)
    nk = pl.num_programs(2)
    nv = nvalid_ref[e]

    # Zero the cross-etype accumulator at the start of each dst tile.
    @pl.when(jnp.logical_and(e == 0, k == 0))
    def _():
        acc_ref[...] = jnp.zeros_like(acc_ref)

    # Zero the per-etype partial matmul / degree accumulators at each K start.
    @pl.when(k == 0)
    def _():
        agg_ref[...] = jnp.zeros_like(agg_ref)
        deg_ref[...] = jnp.zeros_like(deg_ref)

    # Only do work on K tiles that can hold real source columns; for k >= nv the
    # index_maps re-point at the last valid block, so there is no DMA either.
    @pl.when(k < nv)
    def _():
        a = a_ref[...].astype(jnp.bfloat16)          # int8 0/1 -> bf16 for the MXU
        # In-degree row-sum on the tile already in registers, f32 accumulation.
        deg_ref[...] += jnp.sum(a, axis=-1, keepdims=True, dtype=jnp.float32)
        # (A @ Wh) partial, bf16 x bf16 on the MXU with f32 accumulation.
        agg_ref[...] += jnp.dot(a, wh_ref[...], preferred_element_type=jnp.float32)

    # Per-etype epilogue once the K reduction for this etype is complete.
    @pl.when(k == nk - 1)
    def _():
        deg = deg_ref[...]
        inv_deg = jnp.where(deg > 0, 1.0 / jnp.maximum(deg, 1.0), 0.0)
        has_edge = (deg > 0).astype(jnp.float32)
        # bias folded past the aggregation; masked so deg==0 nodes stay 0 (DGL).
        acc_ref[...] += agg_ref[...] * inv_deg + b_ref[...] * has_edge

    # Cross-etype 'mean' reducer + writeback on the very last iteration.
    @pl.when(jnp.logical_and(e == ne - 1, k == nk - 1))
    def _():
        out_ref[...] = (acc_ref[...] * (1.0 / ne)).astype(out_ref.dtype)


def _aggregate(n_valid, a_stack, wh_stack, b_stack, tile_dst, tile_k):
    """a_stack (R, Ndst_pad, Nsrc_pad) int8, wh (R, Nsrc_pad, OUT_pad) bf16,
    b_stack (R, 1, OUT_pad) f32, n_valid (R,) i32 -> (Ndst_pad, OUT_pad) f32."""
    r, n_dst_pad, n_src_pad = a_stack.shape
    out_pad = wh_stack.shape[2]
    grid = (n_dst_pad // tile_dst, r, n_src_pad // tile_k)
    return pl.pallas_call(
        _agg_kernel,
        out_shape=jax.ShapeDtypeStruct((n_dst_pad, out_pad), jnp.float32),
        grid_spec=pltpu.PrefetchScalarGridSpec(
            num_scalar_prefetch=1,
            grid=grid,
            in_specs=[
                pl.BlockSpec(
                    (None, tile_dst, tile_k),
                    lambda d, e, k, nv: (e, d, jnp.minimum(k, nv[e] - 1)),
                ),
                pl.BlockSpec(
                    (None, tile_k, out_pad),
                    lambda d, e, k, nv: (e, jnp.minimum(k, nv[e] - 1), 0),
                ),
                pl.BlockSpec((None, 1, out_pad), lambda d, e, k, nv: (e, 0, 0)),
            ],
            out_specs=pl.BlockSpec((tile_dst, out_pad), lambda d, e, k, nv: (d, 0)),
            scratch_shapes=[
                pltpu.VMEM((tile_dst, out_pad), jnp.float32),  # cross-etype acc
                pltpu.VMEM((tile_dst, out_pad), jnp.float32),  # per-etype A@Wh partial
                pltpu.VMEM((tile_dst, 1), jnp.float32),        # per-etype degree
            ],
        ),
        compiler_params=pltpu.CompilerParams(
            dimension_semantics=("parallel", "arbitrary", "arbitrary"),
            vmem_limit_bytes=48 * 1024 * 1024,
        ),
    )(n_valid, a_stack, wh_stack, b_stack)


# ----------------------------------------------------------------------------
# Layer wrapper: pad/stack per dst ntype, run the two fused kernels, unpad.
# ----------------------------------------------------------------------------
def _round_up(x, m):
    return ((x + m - 1) // m) * m


def _pad2(x, rows, cols, dtype):
    x = jnp.asarray(x).astype(dtype)
    return jnp.pad(x, ((0, rows - x.shape[0]), (0, cols - x.shape[1])))


def rgcn_layer_forward(canonical_etypes, adjs, params, feat_dict, ntypes,
                       tile_dst=512, tile_k=512, tile_src=512):
    """canonical_etypes: list of (src, etype, dst); adjs[etype] dense (N_dst, N_src);
    params[etype] = (W_t (in,out), b (1,out)); feat_dict[ntype] (N, in).
    Returns {ntype: (N, out)} for every ntype with at least one incoming relation
    (ntypes with none are dropped, matching the original behavior)."""
    out = {}
    for nt in ntypes:
        rels = [(s, e) for (s, e, d) in canonical_etypes if d == nt]
        if not rels:
            continue
        in_size, out_size = params[rels[0][1]][0].shape
        n_dst = adjs[rels[0][1]].shape[0]
        max_src = max(feat_dict[s].shape[0] for s, _ in rels)

        in_pad = _round_up(in_size, 128)
        out_pad = _round_up(out_size, 128)

        # ---- tile selection (clamped to the 128-padded problem) ----
        n_dst_128 = _round_up(n_dst, 128)
        td = min(_round_up(tile_dst, 128), n_dst_128)
        # Keep >= 2 dst blocks where possible so the parallel dst axis can split
        # across both TensorCores on v7x.
        if n_dst_128 // td < 2 and n_dst_128 >= 256:
            td = _round_up(n_dst_128 // 2, 128)
        src_128 = _round_up(max_src, 128)
        tk = min(_round_up(tile_k, 128), src_128)
        ts = min(_round_up(tile_src, 128), src_128)

        n_dst_pad = _round_up(n_dst, td)
        # lcm so BOTH the stage-1 (tile_src) and stage-2 (tile_k) grids divide.
        n_src_pad = _round_up(max_src, math.lcm(tk, ts))

        # ---- one fused pad+stack per array (no per-relation scatter chain) ----
        x_stack = jnp.stack(
            [_pad2(feat_dict[s], n_src_pad, in_pad, jnp.bfloat16) for s, _ in rels])
        w_stack = jnp.stack(
            [_pad2(params[e][0], in_pad, out_pad, jnp.bfloat16) for _, e in rels])
        b_stack = jnp.stack(
            [_pad2(params[e][1], 1, out_pad, jnp.float32) for _, e in rels])
        a_stack = jnp.stack(
            [_pad2(adjs[e], n_dst_pad, n_src_pad, jnp.int8) for _, e in rels])
        # Number of K tiles that can contain real source columns, per etype.
        n_valid = jnp.array(
            [max(1, -(-feat_dict[s].shape[0] // tk)) for s, _ in rels], jnp.int32)

        wh = _wh_all_etypes(x_stack, w_stack, ts)
        h_pad = _aggregate(n_valid, a_stack, wh, b_stack, td, tk)
        out[nt] = h_pad[:n_dst, :out_size]
    return out


if __name__ == "__main__":
    key = jax.random.PRNGKey(0)

    # Small synthetic heterograph: 2 node types, 3 relations. Sizes chosen to
    # exercise padding (64 -> 128 features), multi-tile dst grids, multi-K
    # accumulation and the zero-K-tile skip (item has only 96 src nodes).
    in_size, out_size = 64, 64
    n_user, n_item = 160, 96
    ntypes = ["user", "item"]
    canonical_etypes = [
        ("user", "follows", "user"),
        ("user", "clicks", "item"),
        ("item", "clicked_by", "user"),
    ]
    n_nodes = {"user": n_user, "item": n_item}

    k_feat_u, k_feat_i, key = jax.random.split(key, 3)
    feat_dict = {
        "user": jax.random.normal(k_feat_u, (n_user, in_size), dtype=jnp.float32),
        "item": jax.random.normal(k_feat_i, (n_item, in_size), dtype=jnp.float32),
    }

    # Dense binary adjacency per relation (rows = dst nodes, cols = src nodes).
    adjs = {}
    for (src, et, dst) in canonical_etypes:
        key, k_adj = jax.random.split(key)
        adjs[et] = (jax.random.uniform(k_adj, (n_nodes[dst], n_nodes[src])) < 0.3
                    ).astype(jnp.float32)

    # Per-etype Linear params (PyTorch stores W (out,in); we keep transposed (in,out)).
    params = {}
    for (_, et, _) in canonical_etypes:
        key, k_w, k_b = jax.random.split(key, 3)
        w_t = jax.random.normal(k_w, (in_size, out_size), dtype=jnp.float32) * 0.1
        b = jax.random.normal(k_b, (1, out_size), dtype=jnp.float32) * 0.1
        params[et] = (w_t, b)

    # Run the layer (Pallas kernels). Small explicit tiles so the demo exercises
    # multi-tile grids + the K-tile skip; production defaults are 512.
    out = rgcn_layer_forward(canonical_etypes, adjs, params, feat_dict, ntypes,
                             tile_dst=128, tile_k=128, tile_src=128)
    out = {k: jax.block_until_ready(v) for k, v in out.items()}

    # Pure-JAX reference mirroring the kernel's numerics (bf16 matmul inputs,
    # f32 accumulation, bias folded past aggregation and masked by deg>0 --
    # equivalent to mean over edges of (x@W + b) in exact arithmetic).
    ref_per_dst = {nt: [] for nt in ntypes}
    for (src, et, dst) in canonical_etypes:
        w_t, b = params[et]
        x_b = feat_dict[src].astype(jnp.bfloat16)
        w_b = w_t.astype(jnp.bfloat16)
        wh = jnp.dot(x_b, w_b, preferred_element_type=jnp.float32).astype(jnp.bfloat16)
        a_b = adjs[et].astype(jnp.bfloat16)
        agg = jnp.dot(a_b, wh, preferred_element_type=jnp.float32)
        deg = jnp.sum(adjs[et], axis=1, keepdims=True)
        inv = jnp.where(deg > 0, 1.0 / jnp.maximum(deg, 1.0), 0.0)
        ref_per_dst[dst].append(agg * inv + jnp.where(deg > 0, b, 0.0))
    for nt in ntypes:
        if ref_per_dst[nt]:
            ref = sum(ref_per_dst[nt]) / float(len(ref_per_dst[nt]))
            assert jnp.allclose(out[nt], ref, atol=2e-3, rtol=2e-3), nt

    print("KERNEL_OK")
</pallas_src>

<mosaic_0001>
module attributes {stable_mosaic.version = 11 : i64} {
  func.func @_wh_kernel(%arg0: i32, %arg1: i32, %arg2: memref<1x128x128xbf16, #tpu.memory_space<vmem>>, %arg3: memref<1x128x128xbf16, #tpu.memory_space<vmem>>, %arg4: memref<1x128x128xbf16, #tpu.memory_space<vmem>>) attributes {dimension_semantics = [#tpu.dimension_semantics<parallel>, #tpu.dimension_semantics<parallel>], iteration_bounds = array<i64: 2, 2>, scalar_prefetch = 0 : i64, scratch_operands = 0 : i64, tpu.core_type = #tpu.core_type<tc>, window_params = [{transform_indices = @transform_0, window_bounds = array<i64: 1, 128, 128>}, {transform_indices = @transform_1, window_bounds = array<i64: 1, 128, 128>}, {transform_indices = @transform_2, window_bounds = array<i64: 1, 128, 128>}]} {
    %c0 = arith.constant 0 : index
    %c0_0 = arith.constant 0 : index
    %c0_1 = arith.constant 0 : index
    %0 = vector.load %arg2[%c0, %c0_0, %c0_1] : memref<1x128x128xbf16, #tpu.memory_space<vmem>>, vector<1x128x128xbf16>
    %1 = vector.shape_cast %0 : vector<1x128x128xbf16> to vector<128x128xbf16>
    %c0_2 = arith.constant 0 : index
    %c0_3 = arith.constant 0 : index
    %c0_4 = arith.constant 0 : index
    %2 = vector.load %arg3[%c0_2, %c0_3, %c0_4] : memref<1x128x128xbf16, #tpu.memory_space<vmem>>, vector<1x128x128xbf16>
    %3 = vector.shape_cast %2 : vector<1x128x128xbf16> to vector<128x128xbf16>
    %cst = arith.constant dense<0.000000e+00> : vector<128x128xf32>
    %4 = tpu.matmul %1, %3, %cst {dimension_numbers = #tpu.dot_dimension_numbers<[1], [0], [0], [1], [0, 0, 1, 1], [], []>} : vector<128x128xbf16>, vector<128x128xbf16>, vector<128x128xf32> -> vector<128x128xf32>
    %5 = arith.truncf %4 : vector<128x128xf32> to vector<128x128xbf16>
    %c0_5 = arith.constant 0 : index
    %c0_6 = arith.constant 0 : index
    %c0_7 = arith.constant 0 : index
    %6 = vector.load %arg4[%c0_5, %c0_6, %c0_7] : memref<1x128x128xbf16, #tpu.memory_space<vmem>>, vector<1x128x128xbf16>
    %7 = vector.shape_cast %6 : vector<1x128x128xbf16> to vector<128x128xbf16>
    %8 = vector.shape_cast %5 : vector<128x128xbf16> to vector<1x128x128xbf16>
    tpu.vector_store %arg4[%c0_5, %c0_6, %c0_7], %8 {strides = array<i32>} : memref<1x128x128xbf16, #tpu.memory_space<vmem>>, vector<1x128x128xbf16>,
    return
  }
  func.func @transform_0(%arg0: i32, %arg1: i32) -> (i32, i32, i32) {
    %c0_i32 = arith.constant 0 : i32
    %c0_i32_0 = arith.constant 0 : i32
    return %arg0, %arg1, %c0_i32 : i32, i32, i32
  }
  func.func @transform_1(%arg0: i32, %arg1: i32) -> (i32, i32, i32) {
    %c0_i32 = arith.constant 0 : i32
    %c0_i32_0 = arith.constant 0 : i32
    %c0_i32_1 = arith.constant 0 : i32
    return %arg0, %c0_i32, %c0_i32_0 : i32, i32, i32
  }
  func.func @transform_2(%arg0: i32, %arg1: i32) -> (i32, i32, i32) {
    %c0_i32 = arith.constant 0 : i32
    %c0_i32_0 = arith.constant 0 : i32
    return %arg0, %arg1, %c0_i32 : i32, i32, i32
  }
}

</mosaic_0001>

<llo_original>
// kernel: tpu_custom_call.1
$region0: #{tpu_custom_call.1}
  #allocation0 [shape = 'u32[]', space=smem, size = 0x4, offset = 0x4, fixed_abs, tag = 'smem constant byte address 0x4 - core index']
  #allocation1 [shape = 'u32[72,128]{1,0:T(1,128)}', space=vmem, size = 0x9000, scoped, tag = 'internal scratch']
  %s0 = inlined_call_operand.hbm [shape: bf16[2,256,128], index: 0, kind: input, shape index: {}]
  %s1 = inlined_call_operand.hbm [shape: bf16[2,128,128], index: 1, kind: input, shape index: {}]
  %s2 = inlined_call_operand.hbm [shape: bf16[2,256,128], index: 2, kind: output, shape index: {}]
  %s3 = sld [smem:[#allocation0]]
  $region49: #{tpu_custom_call.1} parent=0
    _
  %s5 = ssub.s32 1, %s3
  %s6 = scalar_select 0, %s5, %s3
  $region1: #{tpu_custom_call.1} parent=0
    #allocation2 [shape = 'u8[65536]{0}', space=vmem, size = 0x10000, scoped, tag = 'input window, operand 0']
    #allocation3 [shape = 's32[2]{0}', space=sflag, size = 0x8, scoped, tag = 'scoped memory for tpu_custom_call.1']
    #allocation4 [shape = 's32[2]{0}', space=sflag, size = 0x8, scoped, tag = 'scoped memory for tpu_custom_call.1']
    #allocation5 [shape = 'u8[65536]{0}', space=vmem, size = 0x10000, scoped, tag = 'input window, operand 1']
    #allocation6 [shape = 's32[2]{0}', space=sflag, size = 0x8, scoped, tag = 'scoped memory for tpu_custom_call.1']
    #allocation7 [shape = 'u8[65536]{0}', space=vmem, size = 0x10000, scoped, tag = 'output window, operand 0']
    %7 = vsyncpa [#allocation3], 0
    %s8 = scalar_lea.sflag [#allocation3], 1
    %9 = vsyncpa %s8, 0
    %10 = vsyncpa [#allocation6], 0
    %s11 = scalar_lea.sflag [#allocation6], 1
    %12 = vsyncpa %s11, 0
    %13 = vsyncpa [#allocation4], 0
    %s14 = scalar_lea.sflag [#allocation4], 1
    %15 = vsyncpa %s14, 0
    loop: start=0, step=1, limit=6
    $region2: #{tpu_custom_call.1} parent=1 // loop_pre_header
      _
    $region3: #{tpu_custom_call.1} parent=1 // loop_header
      %s17 = sphi 0, %s21
      %p18 = scmp.ge.s32.totalorder %s17, 6
      %s24 = sphi 0, %s36
      %s25 = sphi 0, %s32
      %s26 = sphi 0, %s24
      %s27 = sphi 0, %s25
      %s28 = sphi 0, %s26
      %s29 = sphi 0, %s27
      %s41 = sphi 0, %s43
      %s44 = sphi 0, %s41
      %s45 = sphi 0, %s44
      %s61 = sphi 0, %s45
      %s67 = sphi 0, %s69
      %s70 = sphi 0, %s67
      %s71 = sphi 0, %s70
      %s87 = sphi 0, %s71
      %s95 = sphi 0, %s97
      %s98 = sphi 0, %s95
      %s99 = sphi 0, %s98
      %s115 = sphi 0, %s99
    $region4: #{tpu_custom_call.1} parent=1 // loop_header_branch
      %20 = sbr.rel (%p18) target = $region8
    $region5: #{tpu_custom_call.1} parent=1 // loop_body
      %s22 = ssub.s32 %s17, 1
      %s23 = ssub.s32 %s17, 2
      %s30 = sadd.s32 1, %s25
      %p31 = scmp.ge.s32.totalorder %s30, 2
      %s32 = scalar_select %p31, 0, %s30
      %s33 = sadd.s32 1, %s24
      %s34 = scalar_select %p31, %s33, %s24
      %p35 = scmp.ge.s32.totalorder %s34, 2
      %s36 = scalar_select %p35, 0, %s34
      %s37 = ssub.s32 %s24, %s36
      %s38 = ssub.s32 %s25, %s32
      %s39 = sor.u32 %s37, %s38
      %p40 = scmp.eq.s32.totalorder %s39, 0
      %s42 = sadd.s32 %s41, 1
      %s43 = scalar_select %p40, %s41, %s42
      %p46 = pneg %p40
      %p47 = scmp.eq.s32.totalorder %s17, 3
      %p48 = por %p46, %p47
      %p49 = scmp.ne.s32.totalorder %s41, %s44
      %p50 = scmp.eq.s32.totalorder %s17, 0
      %p51 = por %p49, %p50
      %p52 = scmp.ne.s32.totalorder %s41, %s44
      %p53 = scmp.eq.s32.totalorder %s22, 3
      %p54 = por %p52, %p53
      %p55 = scmp.ne.s32.totalorder %s44, %s45
      %p56 = scmp.eq.s32.totalorder %s22, 0
      %p57 = por %p55, %p56
      %p58 = scmp.ne.s32.totalorder %s44, %s45
      %p59 = scmp.eq.s32.totalorder %s23, 3
      %p60 = por %p58, %p59
      %p62 = scmp.ne.s32.totalorder %s45, %s61
      %p63 = scmp.eq.s32.totalorder %s23, 0
      %p64 = por %p62, %p63
      %s65 = ssub.s32 %s24, %s36
      %p66 = scmp.eq.s32.totalorder %s65, 0
      %s68 = sadd.s32 %s67, 1
      %s69 = scalar_select %p66, %s67, %s68
      %p72 = pneg %p66
      %p73 = scmp.eq.s32.totalorder %s17, 3
      %p74 = por %p72, %p73
      %p75 = scmp.ne.s32.totalorder %s67, %s70
      %p76 = scmp.eq.s32.totalorder %s17, 0
      %p77 = por %p75, %p76
      %p78 = scmp.ne.s32.totalorder %s67, %s70
      %p79 = scmp.eq.s32.totalorder %s22, 3
      %p80 = por %p78, %p79
      %p81 = scmp.ne.s32.totalorder %s70, %s71
      %p82 = scmp.eq.s32.totalorder %s22, 0
      %p83 = por %p81, %p82
      %p84 = scmp.ne.s32.totalorder %s70, %s71
      %p85 = scmp.eq.s32.totalorder %s23, 3
      %p86 = por %p84, %p85
      %p88 = scmp.ne.s32.totalorder %s71, %s87
      %p89 = scmp.eq.s32.totalorder %s23, 0
      %p90 = por %p88, %p89
      %s91 = ssub.s32 %s24, %s36
      %s92 = ssub.s32 %s25, %s32
      %s93 = sor.u32 %s91, %s92
      %p94 = scmp.eq.s32.totalorder %s93, 0
      %s96 = sadd.s32 %s95, 1
      %s97 = scalar_select %p94, %s95, %s96
      %p100 = pneg %p94
      %p101 = scmp.eq.s32.totalorder %s17, 3
      %p102 = por %p100, %p101
      %p103 = scmp.ne.s32.totalorder %s95, %s98
      %p104 = scmp.eq.s32.totalorder %s17, 0
      %p105 = por %p103, %p104
      %p106 = scmp.ne.s32.totalorder %s95, %s98
      %p107 = scmp.eq.s32.totalorder %s22, 3
      %p108 = por %p106, %p107
      %p109 = scmp.ne.s32.totalorder %s98, %s99
      %p110 = scmp.eq.s32.totalorder %s22, 0
      %p111 = por %p109, %p110
      %p112 = scmp.ne.s32.totalorder %s98, %s99
      %p113 = scmp.eq.s32.totalorder %s23, 3
      %p114 = por %p112, %p113
      %p116 = scmp.ne.s32.totalorder %s99, %s115
      %p117 = scmp.eq.s32.totalorder %s23, 0
      %p118 = por %p116, %p117
      %p119 = scmp.le.s32.totalorder 1, %s17
      %p120 = scmp.lt.s32.totalorder %s17, 5
      %p121 = pnand %p119, %p120
      %p122 = pneg %p121
      // Predicated region
      $region9: #{tpu_custom_call.1} parent=5 // pred_check
        _
      $region10: #{tpu_custom_call.1} parent=5 // pred_check_branch
        %124 = sbr.rel (%p121) target = $region12
      $region11: #{tpu_custom_call.1} parent=5 // pred_region
        %s125 = ssub.s32 %s17, 1
      $region12: #{tpu_custom_call.1} parent=5 // pred_fallthru
        _
      %p126 = scmp.lt.s32.totalorder %s17, 4
      // Predicated region
      $region13: #{tpu_custom_call.1} parent=5 // pred_check
        %p127 = pneg %p126
      $region14: #{tpu_custom_call.1} parent=5 // pred_check_branch
        %129 = sbr.rel (%p127) target = $region16
      $region15: #{tpu_custom_call.1} parent=5 // pred_region
        // Predicated region
        $region17: #{tpu_custom_call.1} parent=15 // pred_check
          %p130 = pneg %p51
        $region18: #{tpu_custom_call.1} parent=15 // pred_check_branch
          %132 = sbr.rel (%p130) target = $region20
        $region19: #{tpu_custom_call.1} parent=15 // pred_region
          %s133 = sand.u32 %s41, 1
          %s134 = scalar_lea.sflag [#allocation3], %s133
          %s135 = sand.u32 %s41, 1
          %s136 = smul.addr %s135, 64
          %s137 = scalar_lea.vmem [#allocation2], %s136
          %s138 = smul.u32 16, %s25
          %140 = vsyncadd %s134, 0
          %s141 = smul.addr %s24, 32
          %s142 = sadd.s32 %s138, %s141
          %s143 = smul.addr %s142, 4
          %s144 = scalar_lea.hbm %s0, %s143
          %s145 = sshll.u32 %s144, 4
          %s146 = int_to_ptr.hbm [resolvable:$true] %s145
          %s147 = sshll.u32 %s137, 4
          %s148 = int_to_ptr.vmem [resolvable:$true] %s147
          %153 = dma.hbm_to_vmem [thread:$0]  %s146, 1024, %s148, %s134, 64, 64, 4
        $region20: #{tpu_custom_call.1} parent=15 // pred_fallthru
          _
        // Predicated region
        $region21: #{tpu_custom_call.1} parent=15 // pred_check
          %p154 = pneg %p77
        $region22: #{tpu_custom_call.1} parent=15 // pred_check_branch
          %156 = sbr.rel (%p154) target = $region24
        $region23: #{tpu_custom_call.1} parent=15 // pred_region
          %s157 = sand.u32 %s67, 1
          %s158 = scalar_lea.sflag [#allocation6], %s157
          %s159 = sand.u32 %s67, 1
          %s160 = smul.addr %s159, 64
          %s161 = scalar_lea.vmem [#allocation5], %s160
          %163 = vsyncadd %s158, 0
          %s164 = smul.addr %s24, 16
          %s165 = smul.addr %s164, 4
          %s166 = scalar_lea.hbm %s1, %s165
          %s167 = sshll.u32 %s166, 4
          %s168 = int_to_ptr.hbm [resolvable:$true] %s167
          %s169 = sshll.u32 %s161, 4
          %s170 = int_to_ptr.vmem [resolvable:$true] %s169
          %175 = dma.hbm_to_vmem [thread:$0]  %s168, 1024, %s170, %s158, 64, 64, 4
        $region24: #{tpu_custom_call.1} parent=15 // pred_fallthru
          _
      $region16: #{tpu_custom_call.1} parent=5 // pred_fallthru
        _
      %p176 = scmp.le.s32.totalorder 1, %s17
      %p177 = scmp.lt.s32.totalorder %s17, 5
      %p178 = pnand %p176, %p177
      %p179 = pneg %p178
      // Predicated region
      $region25: #{tpu_custom_call.1} parent=5 // pred_check
        _
      $region26: #{tpu_custom_call.1} parent=5 // pred_check_branch
        %181 = sbr.rel (%p178) target = $region28
      $region27: #{tpu_custom_call.1} parent=5 // pred_region
        %s182 = ssub.s32 %s17, 1
        %s183 = sand.u32 %s44, 1
        %s184 = scalar_lea.sflag [#allocation3], %s183
        %s185 = sand.u32 %s44, 1
        %s186 = smul.addr %s185, 64
        %s187 = scalar_lea.vmem [#allocation2], %s186
        // Predicated region
        $region29: #{tpu_custom_call.1} parent=27 // pred_check
          %p188 = pneg %p57
        $region30: #{tpu_custom_call.1} parent=27 // pred_check_branch
          %190 = sbr.rel (%p188) target = $region32
        $region31: #{tpu_custom_call.1} parent=27 // pred_region
          %192 = dma.done %s184, 1024
        $region32: #{tpu_custom_call.1} parent=27 // pred_fallthru
          _
        %s193 = sand.u32 %s70, 1
        %s194 = scalar_lea.sflag [#allocation6], %s193
        %s195 = sand.u32 %s70, 1
        %s196 = smul.addr %s195, 64
        %s197 = scalar_lea.vmem [#allocation5], %s196
        // Predicated region
        $region33: #{tpu_custom_call.1} parent=27 // pred_check
          %p198 = pneg %p83
        $region34: #{tpu_custom_call.1} parent=27 // pred_check_branch
          %200 = sbr.rel (%p198) target = $region36
        $region35: #{tpu_custom_call.1} parent=27 // pred_region
          %202 = dma.done %s194, 1024
        $region36: #{tpu_custom_call.1} parent=27 // pred_fallthru
          _
        %s203 = sand.u32 %s44, 1
        %s204 = scalar_lea.sflag [#allocation3], %s203
        %s205 = sand.u32 %s44, 1
        %s206 = smul.addr %s205, 64
        %s207 = scalar_lea.vmem [#allocation2], %s206
        %p208 = pneg %p57
        %p209 = pneg %p54
        %s210 = sand.u32 %s70, 1
        %s211 = scalar_lea.sflag [#allocation6], %s210
        %s212 = sand.u32 %s70, 1
        %s213 = smul.addr %s212, 64
        %s214 = scalar_lea.vmem [#allocation5], %s213
        %p215 = pneg %p83
        %p216 = pneg %p80
        %p217 = pneg %p111
        %p218 = pneg %p108
        %s219 = sand.u32 %s98, 1
        %s220 = scalar_lea.sflag [#allocation4], %s219
        %s221 = sand.u32 %s98, 1
        %s222 = smul.addr %s221, 64
        %s223 = scalar_lea.vmem [#allocation7], %s222
        %s224 = smul.u32 16, %s27
        %s225 = smul.u32 16, %s27
        %v226 = vld [vmem:[%s187] sm:$0xf]
        %v227 = vld [vmem:[%s187 + $0x4] sm:$0xf]
        %v228 = vld [vmem:[%s187 + $0x8] sm:$0xf]
        %v229 = vld [vmem:[%s187 + $0xc] sm:$0xf]
        %v230 = vld [vmem:[%s187 + $0x10] sm:$0xf]
        %v231 = vld [vmem:[%s187 + $0x14] sm:$0xf]
        %v232 = vld [vmem:[%s187 + $0x18] sm:$0xf]
        %v233 = vld [vmem:[%s187 + $0x1c] sm:$0xf]
        %v234 = vld [vmem:[%s187 + $0x20] sm:$0xf]
        %v235 = vld [vmem:[%s187 + $0x24] sm:$0xf]
        %v236 = vld [vmem:[%s187 + $0x28] sm:$0xf]
        %v237 = vld [vmem:[%s187 + $0x2c] sm:$0xf]
        %v238 = vld [vmem:[%s187 + $0x30] sm:$0xf]
        %v239 = vld [vmem:[%s187 + $0x34] sm:$0xf]
        %v240 = vld [vmem:[%s187 + $0x38] sm:$0xf]
        %v241 = vld [vmem:[%s187 + $0x3c] sm:$0xf]
        %v242 = vld [vmem:[%s197] sm:$0xf]
        %v243 = vld [vmem:[%s197 + $0x4] sm:$0xf]
        %v244 = vld [vmem:[%s197 + $0x8] sm:$0xf]
        %v245 = vld [vmem:[%s197 + $0xc] sm:$0xf]
        %v246 = vld [vmem:[%s197 + $0x10] sm:$0xf]
        %v247 = vld [vmem:[%s197 + $0x14] sm:$0xf]
        %v248 = vld [vmem:[%s197 + $0x18] sm:$0xf]
        %v249 = vld [vmem:[%s197 + $0x1c] sm:$0xf]
        %v250 = vld [vmem:[%s197 + $0x20] sm:$0xf]
        %v251 = vld [vmem:[%s197 + $0x24] sm:$0xf]
        %v252 = vld [vmem:[%s197 + $0x28] sm:$0xf]
        %v253 = vld [vmem:[%s197 + $0x2c] sm:$0xf]
        %v254 = vld [vmem:[%s197 + $0x30] sm:$0xf]
        %v255 = vld [vmem:[%s197 + $0x34] sm:$0xf]
        %v256 = vld [vmem:[%s197 + $0x38] sm:$0xf]
        %v257 = vld [vmem:[%s197 + $0x3c] sm:$0xf]
        %v274 = vunpack.c.l.b16 %v226
        %v275 = vunpack.c.l.b16 %v227
        %v276 = vunpack.c.l.b16 %v228
        %v277 = vunpack.c.l.b16 %v229
        %v278 = vunpack.c.l.b16 %v230
        %v279 = vunpack.c.l.b16 %v231
        %v280 = vunpack.c.l.b16 %v232
        %v281 = vunpack.c.l.b16 %v233
        %v282 = vunpack.c.l.b16 %v234
        %v283 = vunpack.c.l.b16 %v235
        %v284 = vunpack.c.l.b16 %v236
        %v285 = vunpack.c.l.b16 %v237
        %v286 = vunpack.c.l.b16 %v238
        %v287 = vunpack.c.l.b16 %v239
        %v288 = vunpack.c.l.b16 %v240
        %v289 = vunpack.c.l.b16 %v241
        %v290 = vpack.c.b16 %v275, %v274
        %v291 = vpack.c.b16 %v277, %v276
        %v292 = vpack.c.b16 %v279, %v278
        %v293 = vpack.c.b16 %v281, %v280
        %v294 = vpack.c.b16 %v283, %v282
        %v295 = vpack.c.b16 %v285, %v284
        %v296 = vpack.c.b16 %v287, %v286
        %v297 = vpack.c.b16 %v289, %v288
        %v322 = vunpack.c.l.b16 %v242
        %v323 = vunpack.c.l.b16 %v243
        %v324 = vunpack.c.l.b16 %v244
        %v325 = vunpack.c.l.b16 %v245
        %v326 = vunpack.c.l.b16 %v246
        %v327 = vunpack.c.l.b16 %v247
        %v328 = vunpack.c.l.b16 %v248
        %v329 = vunpack.c.l.b16 %v249
        %v330 = vunpack.c.l.b16 %v250
        %v331 = vunpack.c.l.b16 %v251
        %v332 = vunpack.c.l.b16 %v252
        %v333 = vunpack.c.l.b16 %v253
        %v334 = vunpack.c.l.b16 %v254
        %v335 = vunpack.c.l.b16 %v255
        %v336 = vunpack.c.l.b16 %v256
        %v337 = vunpack.c.l.b16 %v257
        %v338 = vpack.c.b16 %v323, %v322
        %v339 = vpack.c.b16 %v325, %v324
        %v340 = vpack.c.b16 %v327, %v326
        %v341 = vpack.c.b16 %v329, %v328
        %v342 = vpack.c.b16 %v331, %v330
        %v343 = vpack.c.b16 %v333, %v332
        %v344 = vpack.c.b16 %v335, %v334
        %v345 = vpack.c.b16 %v337, %v336
        %354 = vmatpush.bf16.msra.mxu0 %v345
        %355 = vmatpush.bf16.msra.mxu0 %v344
        %356 = vmatpush.bf16.msra.mxu0 %v343
        %357 = vmatpush.bf16.msra.mxu0 %v342
        %358 = vmatpush.bf16.msra.mxu0 %v341
        %359 = vmatpush.bf16.msra.mxu0 %v340
        %360 = vmatpush.bf16.msra.mxu0 %v339
        %361 = vmatpush.bf16.msra.mxu0 %v338
        %362 = vmatmul.bf16.gmra.mxu0 %v290
        %v363 = vpop.f32.mrf.mxu0
        %v364 = vadd.f32 0.0, %v363
        %v365 = vpop.f32.mrf.mxu0
        %v366 = vadd.f32 0.0, %v365
        %367 = vmatmul.bf16.gmra.mxu0 %v291
        %v368 = vpop.f32.mrf.mxu0
        %v369 = vadd.f32 0.0, %v368
        %v370 = vpop.f32.mrf.mxu0
        %v371 = vadd.f32 0.0, %v370
        %372 = vmatmul.bf16.gmra.mxu0 %v292
        %v373 = vpop.f32.mrf.mxu0
        %v374 = vadd.f32 0.0, %v373
        %v375 = vpop.f32.mrf.mxu0
        %v376 = vadd.f32 0.0, %v375
        %377 = vmatmul.bf16.gmra.mxu0 %v293
        %v378 = vpop.f32.mrf.mxu0
        %v379 = vadd.f32 0.0, %v378
        %v380 = vpop.f32.mrf.mxu0
        %v381 = vadd.f32 0.0, %v380
        %382 = vmatmul.bf16.gmra.mxu0 %v294
        %v383 = vpop.f32.mrf.mxu0
        %v384 = vadd.f32 0.0, %v383
        %v385 = vpop.f32.mrf.mxu0
        %v386 = vadd.f32 0.0, %v385
        %387 = vmatmul.bf16.gmra.mxu0 %v295
        %v388 = vpop.f32.mrf.mxu0
        %v389 = vadd.f32 0.0, %v388
        %v390 = vpop.f32.mrf.mxu0
        %v391 = vadd.f32 0.0, %v390
        %392 = vmatmul.bf16.gmra.mxu0 %v296
        %v393 = vpop.f32.mrf.mxu0
        %v394 = vadd.f32 0.0, %v393
        %v395 = vpop.f32.mrf.mxu0
        %v396 = vadd.f32 0.0, %v395
        %397 = vmatmul.bf16.gmra.mxu0 %v297
        %v398 = vpop.f32.mrf.mxu0
        %v399 = vadd.f32 0.0, %v398
        %v400 = vpop.f32.mrf.mxu0
        %v401 = vadd.f32 0.0, %v400
        %402 = vdwg.mxu0
        %v403 = vpack.c.bf16 %v364, %v364
        %v404 = vpack.c.bf16 %v366, %v366
        %v405 = vpack.c.bf16 %v369, %v369
        %v406 = vpack.c.bf16 %v371, %v371
        %v407 = vpack.c.bf16 %v374, %v374
        %v408 = vpack.c.bf16 %v376, %v376
        %v409 = vpack.c.bf16 %v379, %v379
        %v410 = vpack.c.bf16 %v381, %v381
        %v411 = vpack.c.bf16 %v384, %v384
        %v412 = vpack.c.bf16 %v386, %v386
        %v413 = vpack.c.bf16 %v389, %v389
        %v414 = vpack.c.bf16 %v391, %v391
        %v415 = vpack.c.bf16 %v394, %v394
        %v416 = vpack.c.bf16 %v396, %v396
        %v417 = vpack.c.bf16 %v399, %v399
        %v418 = vpack.c.bf16 %v401, %v401
        %419 = vst [vmem:[%s223] sm:$0xf] %v403
        %420 = vst [vmem:[%s223 + $0x4] sm:$0xf] %v404
        %421 = vst [vmem:[%s223 + $0x8] sm:$0xf] %v405
        %422 = vst [vmem:[%s223 + $0xc] sm:$0xf] %v406
        %423 = vst [vmem:[%s223 + $0x10] sm:$0xf] %v407
        %424 = vst [vmem:[%s223 + $0x14] sm:$0xf] %v408
        %425 = vst [vmem:[%s223 + $0x18] sm:$0xf] %v409
        %426 = vst [vmem:[%s223 + $0x1c] sm:$0xf] %v410
        %427 = vst [vmem:[%s223 + $0x20] sm:$0xf] %v411
        %428 = vst [vmem:[%s223 + $0x24] sm:$0xf] %v412
        %429 = vst [vmem:[%s223 + $0x28] sm:$0xf] %v413
        %430 = vst [vmem:[%s223 + $0x2c] sm:$0xf] %v414
        %431 = vst [vmem:[%s223 + $0x30] sm:$0xf] %v415
        %432 = vst [vmem:[%s223 + $0x34] sm:$0xf] %v416
        %433 = vst [vmem:[%s223 + $0x38] sm:$0xf] %v417
        %434 = vst [vmem:[%s223 + $0x3c] sm:$0xf] %v418
        %s435 = sand.u32 %s98, 1
        %s436 = scalar_lea.sflag [#allocation4], %s435
        %s437 = sand.u32 %s98, 1
        %s438 = smul.addr %s437, 64
        %s439 = scalar_lea.vmem [#allocation7], %s438
        // Predicated region
        $region37: #{tpu_custom_call.1} parent=27 // pred_check
          %p440 = pneg %p108
        $region38: #{tpu_custom_call.1} parent=27 // pred_check_branch
          %442 = sbr.rel (%p440) target = $region40
        $region39: #{tpu_custom_call.1} parent=27 // pred_region
          %s443 = smul.u32 16, %s27
          %445 = vsyncadd %s436, 0
          %s446 = smul.addr %s26, 32
          %s447 = sadd.s32 %s443, %s446
          %s448 = smul.addr %s447, 4
          %s449 = scalar_lea.hbm %s2, %s448
          %s450 = sshll.u32 %s439, 4
          %s451 = int_to_ptr.vmem [resolvable:$true] %s450
          %s452 = sshll.u32 %s449, 4
          %s453 = int_to_ptr.hbm [resolvable:$true] %s452
          %458 = dma.vmem_to_hbm [thread:$0]  %s451, 1024, %s453, %s436, 64, 64, 4
        $region40: #{tpu_custom_call.1} parent=27 // pred_fallthru
          _
      $region28: #{tpu_custom_call.1} parent=5 // pred_fallthru
        _
      %p459 = scmp.le.s32.totalorder 2, %s17
      // Predicated region
      $region41: #{tpu_custom_call.1} parent=5 // pred_check
        %p460 = pneg %p459
      $region42: #{tpu_custom_call.1} parent=5 // pred_check_branch
        %462 = sbr.rel (%p460) target = $region44
      $region43: #{tpu_custom_call.1} parent=5 // pred_region
        %s463 = ssub.s32 %s17, 2
        // Predicated region
        $region45: #{tpu_custom_call.1} parent=43 // pred_check
          %p464 = pneg %p114
        $region46: #{tpu_custom_call.1} parent=43 // pred_check_branch
          %466 = sbr.rel (%p464) target = $region48
        $region47: #{tpu_custom_call.1} parent=43 // pred_region
          %s467 = sand.u32 %s99, 1
          %s468 = scalar_lea.sflag [#allocation4], %s467
          %s469 = sand.u32 %s99, 1
          %s470 = smul.addr %s469, 64
          %s471 = scalar_lea.vmem [#allocation7], %s470
          %473 = dma.done %s468, 1024
        $region48: #{tpu_custom_call.1} parent=43 // pred_fallthru
          _
      $region44: #{tpu_custom_call.1} parent=5 // pred_fallthru
        _
    $region6: #{tpu_custom_call.1} parent=1 // loop_footer
      %s21 = sadd.s32 1, %s17
    $region7: #{tpu_custom_call.1} parent=1 // loop_footer_branch
      %16 = sbr.rel target = $region3
    $region8: #{tpu_custom_call.1} parent=1 // loop_exit
      _
    %474 = vsyncpa [#allocation3], 1
    %s475 = scalar_lea.sflag [#allocation3], 1
    %476 = vsyncpa %s475, 1
    %477 = vsyncpa [#allocation6], 1
    %s478 = scalar_lea.sflag [#allocation6], 1
    %479 = vsyncpa %s478, 1
    %480 = vsyncpa [#allocation4], 1
    %s481 = scalar_lea.sflag [#allocation4], 1
    %482 = vsyncpa %s481, 1

</llo_original>
